<compile_context>
chip_gen: v7x
topology: tpu7x:2x2x1
jax: 0.10.0
libtpu: 0.0.40
codegen_flags: <defaults>
</compile_context>

<pallas_src>
import functools

import jax
import jax.numpy as jnp
from jax import lax
from jax.experimental import pallas as pl
from jax.experimental.pallas import tpu as pltpu


_NEG_FILL = -1e30                 # fill for masked class columns (exp() -> 0)
_MAX_ROW_TILE = 512               # elementwise sweet spot (512-1024 rows)
_MAX_CLASS_TILE = 2048            # class-axis streaming chunk for the CE path
_STEP_BYTES = 12 << 20            # per-grid-step working set (single-buffered)
_VMEM_LIMIT = 48 * 1024 * 1024    # scoped VMEM limit; leaves headroom on 64 MiB chips


def _cdiv(a, b):
    return (a + b - 1) // b


def _round_up(x, m):
    return _cdiv(x, m) * m


def _focal_weight(pt, gamma):
    """(1 - pt) ** gamma, avoiding float-pow (exp+log) when gamma is integral."""
    om = 1.0 - pt
    if isinstance(gamma, (int, float)) and float(gamma) == int(gamma):
        gi = int(gamma)
        if gi == 0:
            return jnp.ones_like(om)
        if gi == 1:
            return om
        if gi == 2:
            return om * om          # single VPU multiply
        return lax.integer_pow(om, gi)
    # Non-integer gamma: clamp the base so fp rounding (pt marginally > 1) can't NaN.
    return jnp.power(jnp.maximum(om, 0.0), gamma)


# -----------------------------------------------------------------------------
# Kernels
# -----------------------------------------------------------------------------
def _focal_ce_kernel(logits_ref, target_ref, out_ref, m_sc, s_sc, p_sc,
                     *, gamma, c_tile, num_classes):
    """Multi-class focal loss.

    Tile: logits (TN, TC), target (TN, 1) int32, output (TN, 1) f32.
    Class axis (grid axis 1, "arbitrary") is streamed with an online
    log-sum-exp; m_sc / s_sc / p_sc are (TN, 1) VMEM accumulators.
    Rows beyond N carry garbage but their output writes are dropped.
    """
    kc = pl.program_id(1)

    @pl.when(kc == 0)
    def _():
        m_sc[...] = jnp.full_like(m_sc, -jnp.inf)
        s_sc[...] = jnp.zeros_like(s_sc)
        p_sc[...] = jnp.zeros_like(p_sc)

    x = logits_ref[...].astype(jnp.float32)              # (TN, TC)
    col = lax.broadcasted_iota(jnp.int32, x.shape, 1)    # local column index

    if num_classes % c_tile != 0:
        # Last class tile extends past C: mask the out-of-bounds columns so
        # clamped-DMA garbage cannot reach the log-sum-exp.  (Static no-op
        # when the class tiling is exact.)
        limit = num_classes - kc * c_tile
        x = jnp.where(col < limit, x, _NEG_FILL)

    # online (streaming) log-sum-exp over the class axis
    m_old = m_sc[...]
    m_new = jnp.maximum(m_old, jnp.max(x, axis=-1, keepdims=True))
    s_sc[...] = (s_sc[...] * jnp.exp(m_old - m_new)
                 + jnp.sum(jnp.exp(x - m_new), axis=-1, keepdims=True))
    m_sc[...] = m_new

    # gather logits[n, target[n]]: shift the target into tile-local coords
    # ((TN,1) subtract) instead of adding kc*c_tile to the full-tile iota.
    tgt_local = target_ref[...] - kc * c_tile            # (TN, 1) int32
    p_sc[...] += jnp.sum(jnp.where(col == tgt_local, x, 0.0),
                         axis=-1, keepdims=True)

    @pl.when(kc == pl.num_programs(1) - 1)
    def _():
        lse = m_sc[...] + jnp.log(s_sc[...])
        ce = jnp.maximum(lse - p_sc[...], 0.0)            # -log p_t >= 0
        pt = jnp.exp(-ce)
        out_ref[...] = (_focal_weight(pt, gamma) * ce).astype(out_ref.dtype)


def _focal_bce_kernel(logits_ref, target_ref, out_ref, *, gamma, binary_targets):
    """Binary (with-logits) focal loss, elementwise on a (TN, C) tile."""
    x = logits_ref[...].astype(jnp.float32)
    t = target_ref[...].astype(jnp.float32)

    e = jnp.exp(-jnp.abs(x))                                   # EUP pass 1
    ce = jnp.maximum(x, 0.0) - x * t + jnp.log1p(e)            # EUP pass 2 (log1p)

    if binary_targets:
        # Exact for t in {0, 1}: pt = sigmoid(x) if t==1 else 1 - sigmoid(x)
        #                           = [1 or e] / (1 + e)  with e = exp(-|x|).
        # Saves a third full-tile exp; exact divide (no approx reciprocal).
        num = jnp.where((x > 0.0) == (t > 0.5), 1.0, e)
        pt = num / (1.0 + e)
    else:
        pt = jnp.exp(-ce)                                      # general (soft) targets

    out_ref[...] = (_focal_weight(pt, gamma) * ce).astype(out_ref.dtype)


# -----------------------------------------------------------------------------
# Tile selection
# -----------------------------------------------------------------------------
def _split_rows(n_rows, tn_cap):
    """Even row split: >=2 tiles when there are enough rows (2-TC chips),
    rounded to the 8-row sublane granule, capped by the VMEM-derived limit."""
    tn_cap = max(8, min(_MAX_ROW_TILE, tn_cap))
    num_tiles = max(_cdiv(n_rows, tn_cap), 2 if n_rows >= 16 else 1)
    return _round_up(_cdiv(n_rows, num_tiles), 8)


def _ce_tiles(n_rows, n_classes, itemsize):
    if n_classes <= _MAX_CLASS_TILE:
        tc = n_classes                                   # full class dim
    else:
        nc = _cdiv(n_classes, _MAX_CLASS_TILE)
        tc = _round_up(_cdiv(n_classes, nc), 128)        # even split, 128-lane granule
    # per grid step: logits (tn, tc) dominates; target/out/scratch are (tn, 1)
    tn = _split_rows(n_rows, _STEP_BYTES // max(tc * itemsize, 1))
    return tn, tc


def _bce_row_tile(n_rows, n_classes, in_bytes, tgt_bytes):
    # per grid step: logits + target + f32 output, all (tn, C), all double-buffered
    per_row = n_classes * (in_bytes + tgt_bytes + 4)
    return _split_rows(n_rows, _STEP_BYTES // max(per_row, 1))


# -----------------------------------------------------------------------------
# Wrapper
# -----------------------------------------------------------------------------
def focal_loss(logits, target, gamma=2, bi=False, binary_targets=True):
    """Pallas implementation of FocalLoss.forward.

    bi=False: logits (N, C) float, target (N,) int          -> (N,) float32
    bi=True : logits (N, C) float, target (N, C) float(0/1) -> (N, C) float32
              (set binary_targets=False for soft targets; uses exp(-ce) then)
    """
    N, C = logits.shape
    in_bytes = jnp.dtype(logits.dtype).itemsize

    if bi:
        tgt_bytes = jnp.dtype(target.dtype).itemsize
        tn = _bce_row_tile(N, C, in_bytes, tgt_bytes)

        kernel = functools.partial(_focal_bce_kernel, gamma=gamma,
                                   binary_targets=binary_targets)
        # TODO(synk): for bf16 callers a bf16 output (and bf16 VPU arithmetic)
        # would halve the write stream on bf16-capable chips; kept f32 here to
        # stay exact and generation-agnostic.
        return pl.pallas_call(
            kernel,
            out_shape=jax.ShapeDtypeStruct((N, C), jnp.float32),
            grid_spec=pltpu.PrefetchScalarGridSpec(
                num_scalar_prefetch=0,
                grid=(_cdiv(N, tn),),
                in_specs=[
                    pl.BlockSpec((tn, C), lambda i: (i, 0)),
                    pl.BlockSpec((tn, C), lambda i: (i, 0)),
                ],
                out_specs=pl.BlockSpec((tn, C), lambda i: (i, 0)),
            ),
            compiler_params=pltpu.CompilerParams(
                dimension_semantics=("parallel",),
                vmem_limit_bytes=_VMEM_LIMIT,
            ),
        )(logits, target)

    # ---- multi-class cross-entropy path -----------------------------------
    tn, tc = _ce_tiles(N, C, in_bytes)
    tgt = target.astype(jnp.int32).reshape(N, 1)         # tiny (N,1), negligible

    kernel = functools.partial(_focal_ce_kernel, gamma=gamma,
                               c_tile=tc, num_classes=C)
    out = pl.pallas_call(
        kernel,
        # TODO(synk): the (tn, 1) output column is a masked 1-lane store; a
        # lane-dense layout would need a sublane->lane transpose at finalize.
        # Output traffic is <= 1/C of the logits read, so it is left simple.
        out_shape=jax.ShapeDtypeStruct((N, 1), jnp.float32),
        grid_spec=pltpu.PrefetchScalarGridSpec(
            num_scalar_prefetch=0,
            grid=(_cdiv(N, tn), _cdiv(C, tc)),
            in_specs=[
                pl.BlockSpec((tn, tc), lambda i, kc: (i, kc)),
                pl.BlockSpec((tn, 1), lambda i, kc: (i, 0)),
            ],
            out_specs=pl.BlockSpec((tn, 1), lambda i, kc: (i, 0)),
            scratch_shapes=[pltpu.VMEM((tn, 1), jnp.float32)] * 3,
        ),
        compiler_params=pltpu.CompilerParams(
            dimension_semantics=("parallel", "arbitrary"),
            vmem_limit_bytes=_VMEM_LIMIT,
        ),
    )(logits, tgt)
    return out[:, 0]


# -----------------------------------------------------------------------------
# Pure-JAX references (correctness check only)
# -----------------------------------------------------------------------------
def _ref_focal_ce(logits, target, gamma=2):
    logp = jax.nn.log_softmax(logits.astype(jnp.float32), axis=-1)
    ce = -jnp.take_along_axis(logp, target[:, None].astype(jnp.int32), axis=-1)[:, 0]
    pt = jnp.exp(-ce)
    return (1.0 - pt) ** gamma * ce


def _ref_focal_bce(logits, target, gamma=2):
    x = logits.astype(jnp.float32)
    t = target.astype(jnp.float32)
    ce = jnp.maximum(x, 0.0) - x * t + jnp.log1p(jnp.exp(-jnp.abs(x)))
    pt = jnp.exp(-ce)
    return (1.0 - pt) ** gamma * ce


if __name__ == "__main__":
    key = jax.random.PRNGKey(0)
    k1, k2, k3, k4, k5, k6 = jax.random.split(key, 6)

    # --- small shapes (primary check) ---------------------------------------
    N, C = 8, 32
    logits = jax.random.normal(k1, (N, C), dtype=jnp.float32)
    target = jax.random.randint(k2, (N,), 0, C, dtype=jnp.int32)

    out_ce = jax.block_until_ready(focal_loss(logits, target, gamma=2, bi=False))
    ref_ce = _ref_focal_ce(logits, target, gamma=2)
    assert out_ce.shape == (N,)
    assert jnp.allclose(out_ce, ref_ce, atol=1e-5, rtol=1e-5)

    bin_target = (jax.random.uniform(k3, (N, C)) > 0.5).astype(jnp.float32)
    out_bce = jax.block_until_ready(focal_loss(logits, bin_target, gamma=2, bi=True))
    ref_bce = _ref_focal_bce(logits, bin_target, gamma=2)
    assert out_bce.shape == (N, C)
    assert jnp.allclose(out_bce, ref_bce, atol=1e-5, rtol=1e-4)

    # --- larger shapes: exercises even-split row tiling (no wrapper padding,
    # partial edge blocks) and the streamed class axis -----------------------
    N2, C2 = 600, 2304
    logits2 = jax.random.normal(k4, (N2, C2), dtype=jnp.float32)
    target2 = jax.random.randint(k5, (N2,), 0, C2, dtype=jnp.int32)
    out_ce2 = jax.block_until_ready(focal_loss(logits2, target2, gamma=2, bi=False))
    ref_ce2 = _ref_focal_ce(logits2, target2, gamma=2)
    assert out_ce2.shape == (N2,)
    assert jnp.allclose(out_ce2, ref_ce2, atol=1e-4, rtol=1e-4)

    N3, C3 = 600, 384
    logits3 = jax.random.normal(k6, (N3, C3), dtype=jnp.float32)
    bin_target3 = (jax.random.uniform(k3, (N3, C3)) > 0.5).astype(jnp.float32)
    out_bce3 = jax.block_until_ready(focal_loss(logits3, bin_target3, gamma=2, bi=True))
    ref_bce3 = _ref_focal_bce(logits3, bin_target3, gamma=2)
    assert out_bce3.shape == (N3, C3)
    assert jnp.allclose(out_bce3, ref_bce3, atol=1e-5, rtol=1e-4)

    print("KERNEL_OK")
</pallas_src>

<mosaic_0001>
module attributes {stable_mosaic.version = 11 : i64} {
  func.func @_focal_ce_kernel(%arg0: i32, %arg1: i32, %arg2: memref<8x32xf32, #tpu.memory_space<vmem>>, %arg3: memref<8x1xi32, #tpu.memory_space<vmem>>, %arg4: memref<8x1xf32, #tpu.memory_space<vmem>>, %arg5: memref<8x1xf32, #tpu.memory_space<vmem>>, %arg6: memref<8x1xf32, #tpu.memory_space<vmem>>, %arg7: memref<8x1xf32, #tpu.memory_space<vmem>>) attributes {dimension_semantics = [#tpu.dimension_semantics<parallel>, #tpu.dimension_semantics<arbitrary>], iteration_bounds = array<i64: 1, 1>, scalar_prefetch = 0 : i64, scratch_operands = 3 : i64, tpu.core_type = #tpu.core_type<tc>, window_params = [{transform_indices = @transform_0, window_bounds = array<i64: 8, 32>}, {transform_indices = @transform_1, window_bounds = array<i64: 8, 1>}, {transform_indices = @transform_2, window_bounds = array<i64: 8, 1>}]} {
    %c0_i32 = arith.constant 0 : i32
    %0 = arith.cmpi eq, %arg1, %c0_i32 : i32
    %1 = arith.extui %0 : i1 to i32
    %c0_i32_0 = arith.constant 0 : i32
    %2 = arith.cmpi ne, %1, %c0_i32_0 : i32
    scf.if %2 {
      %cst_21 = arith.constant 0xFF800000 : f32
      %37 = vector.broadcast %cst_21 : f32 to vector<8x1xf32>
      %c0_22 = arith.constant 0 : index
      %c0_23 = arith.constant 0 : index
      %38 = vector.load %arg5[%c0_22, %c0_23] : memref<8x1xf32, #tpu.memory_space<vmem>>, vector<8x1xf32>
      tpu.vector_store %arg5[%c0_22, %c0_23], %37 {strides = array<i32>} : memref<8x1xf32, #tpu.memory_space<vmem>>, vector<8x1xf32>,
      %cst_24 = arith.constant 0.000000e+00 : f32
      %39 = vector.broadcast %cst_24 : f32 to vector<8x1xf32>
      %c0_25 = arith.constant 0 : index
      %c0_26 = arith.constant 0 : index
      %40 = vector.load %arg6[%c0_25, %c0_26] : memref<8x1xf32, #tpu.memory_space<vmem>>, vector<8x1xf32>
      tpu.vector_store %arg6[%c0_25, %c0_26], %39 {strides = array<i32>} : memref<8x1xf32, #tpu.memory_space<vmem>>, vector<8x1xf32>,
      %cst_27 = arith.constant 0.000000e+00 : f32
      %41 = vector.broadcast %cst_27 : f32 to vector<8x1xf32>
      %c0_28 = arith.constant 0 : index
      %c0_29 = arith.constant 0 : index
      %42 = vector.load %arg7[%c0_28, %c0_29] : memref<8x1xf32, #tpu.memory_space<vmem>>, vector<8x1xf32>
      tpu.vector_store %arg7[%c0_28, %c0_29], %41 {strides = array<i32>} : memref<8x1xf32, #tpu.memory_space<vmem>>, vector<8x1xf32>,
    } else {
    }
    %c0 = arith.constant 0 : index
    %c0_1 = arith.constant 0 : index
    %3 = vector.load %arg2[%c0, %c0_1] : memref<8x32xf32, #tpu.memory_space<vmem>>, vector<8x32xf32>
    %4 = tpu.iota {dimensions = array<i32: 1>} : vector<8x32xi32>
    %c0_2 = arith.constant 0 : index
    %c0_3 = arith.constant 0 : index
    %5 = vector.load %arg5[%c0_2, %c0_3] : memref<8x1xf32, #tpu.memory_space<vmem>>, vector<8x1xf32>
    %cst = arith.constant dense<0xFF800000> : vector<8xf32>
    %6 = vector.multi_reduction <maximumf>, %3, %cst [1] : vector<8x32xf32> to vector<8xf32>
    %7 = vector.shape_cast %6 : vector<8xf32> to vector<8x1xf32>
    %8 = arith.maximumf %5, %7 : vector<8x1xf32>
    %c0_4 = arith.constant 0 : index
    %c0_5 = arith.constant 0 : index
    %9 = vector.load %arg6[%c0_4, %c0_5] : memref<8x1xf32, #tpu.memory_space<vmem>>, vector<8x1xf32>
    %10 = arith.subf %5, %8 : vector<8x1xf32>
    %11 = math.exp %10 : vector<8x1xf32>
    %12 = arith.mulf %9, %11 : vector<8x1xf32>
    %13 = vector.broadcast %8 : vector<8x1xf32> to vector<8x32xf32>
    %14 = arith.subf %3, %13 : vector<8x32xf32>
    %15 = math.exp %14 : vector<8x32xf32>
    %cst_6 = arith.constant dense<0.000000e+00> : vector<8xf32>
    %16 = vector.multi_reduction <add>, %15, %cst_6 [1] : vector<8x32xf32> to vector<8xf32>
    %17 = vector.shape_cast %16 : vector<8xf32> to vector<8x1xf32>
    %18 = arith.addf %12, %17 : vector<8x1xf32>
    %c0_7 = arith.constant 0 : index
    %c0_8 = arith.constant 0 : index
    %19 = vector.load %arg6[%c0_7, %c0_8] : memref<8x1xf32, #tpu.memory_space<vmem>>, vector<8x1xf32>
    tpu.vector_store %arg6[%c0_7, %c0_8], %18 {strides = array<i32>} : memref<8x1xf32, #tpu.memory_space<vmem>>, vector<8x1xf32>,
    %c0_9 = arith.constant 0 : index
    %c0_10 = arith.constant 0 : index
    %20 = vector.load %arg5[%c0_9, %c0_10] : memref<8x1xf32, #tpu.memory_space<vmem>>, vector<8x1xf32>
    tpu.vector_store %arg5[%c0_9, %c0_10], %8 {strides = array<i32>} : memref<8x1xf32, #tpu.memory_space<vmem>>, vector<8x1xf32>,
    %c0_11 = arith.constant 0 : index
    %c0_12 = arith.constant 0 : index
    %21 = vector.load %arg3[%c0_11, %c0_12] : memref<8x1xi32, #tpu.memory_space<vmem>>, vector<8x1xi32>
    %c32_i32 = arith.constant 32 : i32
    %22 = arith.muli %arg1, %c32_i32 : i32
    %23 = vector.broadcast %22 : i32 to vector<8x1xi32>
    %24 = arith.subi %21, %23 : vector<8x1xi32>
    %c0_13 = arith.constant 0 : index
    %c0_14 = arith.constant 0 : index
    %25 = vector.load %arg7[%c0_13, %c0_14] : memref<8x1xf32, #tpu.memory_space<vmem>>, vector<8x1xf32>
    %26 = vector.broadcast %24 : vector<8x1xi32> to vector<8x32xi32>
    %27 = arith.cmpi eq, %4, %26 : vector<8x32xi32>
    %cst_15 = arith.constant 0.000000e+00 : f32
    %28 = vector.broadcast %cst_15 : f32 to vector<8x32xf32>
    %29 = arith.select %27, %3, %28 : vector<8x32xi1>, vector<8x32xf32>
    %cst_16 = arith.constant dense<0.000000e+00> : vector<8xf32>
    %30 = vector.multi_reduction <add>, %29, %cst_16 [1] : vector<8x32xf32> to vector<8xf32>
    %31 = vector.shape_cast %30 : vector<8xf32> to vector<8x1xf32>
    %32 = arith.addf %25, %31 : vector<8x1xf32>
    %c0_17 = arith.constant 0 : index
    %c0_18 = arith.constant 0 : index
    %33 = vector.load %arg7[%c0_17, %c0_18] : memref<8x1xf32, #tpu.memory_space<vmem>>, vector<8x1xf32>
    tpu.vector_store %arg7[%c0_17, %c0_18], %32 {strides = array<i32>} : memref<8x1xf32, #tpu.memory_space<vmem>>, vector<8x1xf32>,
    %c0_i32_19 = arith.constant 0 : i32
    %34 = arith.cmpi eq, %arg1, %c0_i32_19 : i32
    %35 = arith.extui %34 : i1 to i32
    %c0_i32_20 = arith.constant 0 : i32
    %36 = arith.cmpi ne, %35, %c0_i32_20 : i32
    scf.if %36 {
      %c0_21 = arith.constant 0 : index
      %c0_22 = arith.constant 0 : index
      %37 = vector.load %arg5[%c0_21, %c0_22] : memref<8x1xf32, #tpu.memory_space<vmem>>, vector<8x1xf32>
      %c0_23 = arith.constant 0 : index
      %c0_24 = arith.constant 0 : index
      %38 = vector.load %arg6[%c0_23, %c0_24] : memref<8x1xf32, #tpu.memory_space<vmem>>, vector<8x1xf32>
      %39 = math.log %38 : vector<8x1xf32>
      %40 = arith.addf %37, %39 : vector<8x1xf32>
      %c0_25 = arith.constant 0 : index
      %c0_26 = arith.constant 0 : index
      %41 = vector.load %arg7[%c0_25, %c0_26] : memref<8x1xf32, #tpu.memory_space<vmem>>, vector<8x1xf32>
      %42 = arith.subf %40, %41 : vector<8x1xf32>
      %cst_27 = arith.constant 0.000000e+00 : f32
      %43 = vector.broadcast %cst_27 : f32 to vector<8x1xf32>
      %44 = arith.maximumf %42, %43 : vector<8x1xf32>
      %cst_28 = arith.constant 0.000000e+00 : f32
      %45 = vector.broadcast %cst_28 : f32 to vector<8x1xf32>
      %46 = arith.subf %45, %44 : vector<8x1xf32>
      %47 = math.exp %46 : vector<8x1xf32>
      %cst_29 = arith.constant 1.000000e+00 : f32
      %48 = vector.broadcast %cst_29 : f32 to vector<8x1xf32>
      %49 = arith.subf %48, %47 : vector<8x1xf32>
      %50 = arith.mulf %49, %49 : vector<8x1xf32>
      %51 = arith.mulf %50, %44 : vector<8x1xf32>
      %c0_30 = arith.constant 0 : index
      %c0_31 = arith.constant 0 : index
      %52 = vector.load %arg4[%c0_30, %c0_31] : memref<8x1xf32, #tpu.memory_space<vmem>>, vector<8x1xf32>
      tpu.vector_store %arg4[%c0_30, %c0_31], %51 {strides = array<i32>} : memref<8x1xf32, #tpu.memory_space<vmem>>, vector<8x1xf32>,
    } else {
    }
    return
  }
  func.func @transform_0(%arg0: i32, %arg1: i32) -> (i32, i32) {
    %c0_i32 = arith.constant 0 : i32
    return %arg0, %arg1 : i32, i32
  }
  func.func @transform_1(%arg0: i32, %arg1: i32) -> (i32, i32) {
    %c0_i32 = arith.constant 0 : i32
    %c0_i32_0 = arith.constant 0 : i32
    return %arg0, %c0_i32 : i32, i32
  }
  func.func @transform_2(%arg0: i32, %arg1: i32) -> (i32, i32) {
    %c0_i32 = arith.constant 0 : i32
    %c0_i32_0 = arith.constant 0 : i32
    return %arg0, %c0_i32 : i32, i32
  }
}

</mosaic_0001>

<llo_original>
// kernel: tpu_custom_call.1
$region0: #{tpu_custom_call.1}
  #allocation0 [shape = 'u32[]', space=smem, size = 0x4, offset = 0x4, fixed_abs, tag = 'smem constant byte address 0x4 - core index']
  #allocation1 [shape = 'u32[144,128]{1,0:T(1,128)}', space=vmem, size = 0x12000, scoped, tag = 'internal scratch']
  #allocation2 [shape = 'f32[8,1]{1,0:T(8,128)}', space=vmem, size = 0x1000, scoped, tag = 'scratch operand']
  #allocation3 [shape = 'f32[8,1]{1,0:T(8,128)}', space=vmem, size = 0x1000, scoped, tag = 'scratch operand']
  #allocation4 [shape = 'f32[8,1]{1,0:T(8,128)}', space=vmem, size = 0x1000, scoped, tag = 'scratch operand']
  %s0 = inlined_call_operand.vmem [shape: f32[8,32], index: 0, kind: input, shape index: {}]
  %s1 = inlined_call_operand.vmem [shape: s32[8,1], index: 1, kind: input, shape index: {}]
  %s2 = inlined_call_operand.vmem [shape: f32[8,1], index: 2, kind: output, shape index: {}]
  %s3 = sld [smem:[#allocation0]]
  $region26: #{tpu_custom_call.1} parent=0
    _
  %s5 = ssub.s32 1, %s3
  %s6 = scalar_select 0, %s5, %s3
  // Predicated region
  $region2: #{tpu_custom_call.1} parent=0 // pred_check
    _
  $region3: #{tpu_custom_call.1} parent=0 // pred_check_branch
    %8 = sbr.rel (0) target = $region5
  $region4: #{tpu_custom_call.1} parent=0 // pred_region
    _
  $region5: #{tpu_custom_call.1} parent=0 // pred_fallthru
    _
  // Predicated region
  $region6: #{tpu_custom_call.1} parent=0 // pred_check
    _
  $region7: #{tpu_custom_call.1} parent=0 // pred_check_branch
    %10 = sbr.rel (0) target = $region9
  $region8: #{tpu_custom_call.1} parent=0 // pred_region
    _
  $region9: #{tpu_custom_call.1} parent=0 // pred_fallthru
    _
  %p11 = scmp.eq.s32.totalorder 0, 0
  // Predicated region
  $region10: #{tpu_custom_call.1} parent=0 // pred_check
    %p12 = pneg %p11
  $region11: #{tpu_custom_call.1} parent=0 // pred_check_branch
    %14 = sbr.rel (%p12) target = $region13
  $region12: #{tpu_custom_call.1} parent=0 // pred_region
    %vm15 = vcmask 7168
    %16 = vst.msk [vmem:[#allocation2] sm:$0xff] %vm15, -inf
    %17 = vst.msk [vmem:[#allocation3] sm:$0xff] %vm15, 0.0
    %18 = vst.msk [vmem:[#allocation4] sm:$0xff] %vm15, 0.0
  $region13: #{tpu_custom_call.1} parent=0 // pred_fallthru
    _
  %v19 = vld [vmem:[%s0] sm:$0xff]
  %v20 = vlaneseq
  %v21 = vand.u32 %v20, 127
  %v22 = vld [vmem:[#allocation2] sm:$0xff]
  %vm23 = vcmask 261120
  %v24 = vsel %vm23, %v19, -inf
  %25 = vmax.xlane.f32.xlu0 %v24
  %v26 = vpop.xlane.xlu0 %25
  %v27 = vmax.f32 %v22, %v26
  %v28 = vld [vmem:[#allocation3] sm:$0xff]
  %v29 = vsub.f32 %v22, %v27
  %v30 = vmul.f32 %v29, 1.442695
  %v31 = vpow.pop %v30
  %v32 = vmul.f32 %v28, %v31
  %34 = vset.pattern.permute.xlu0 0
  %35 = vperm.xlu0 %34, %v27
  %v36 = vpop.permute.xlu0 %35
  %v38 = vsub.f32 %v19, %v36
  %v39 = vmul.f32 %v38, 1.442695
  %v40 = vpow.pop %v39
  %v41 = vsel %vm23, %v40, 0.0
  %42 = vadd.xlane.f32.xlu0 %v41
  %v43 = vpop.xlane.xlu0 %42
  %v44 = vadd.f32 %v32, %v43
  %vm45 = vcmask 7168
  %46 = vst.msk [vmem:[#allocation3] sm:$0xff] %vm45, %v44
  %47 = vst.msk [vmem:[#allocation2] sm:$0xff] %vm45, %v27
  %v48 = vld [vmem:[%s1] sm:$0xff]
  %s49 = smul.u32 0, 32
  %v50 = vstv %s49
  %v51 = vsub.s32 %v48, %v50
  %v52 = vld [vmem:[#allocation4] sm:$0xff]
  %53 = vset.pattern.permute.xlu0 0
  %54 = vperm.xlu0 %53, %v51
  %v55 = vpop.permute.xlu0 %54
  %vm56 = vcmp.eq.s32.totalorder %v21, %v55
  %v57 = vsel %vm56, %v19, 0.0
  %v58 = vsel %vm23, %v57, 0.0
  %59 = vadd.xlane.f32.xlu0 %v58
  %v60 = vpop.xlane.xlu0 %59
  %v61 = vadd.f32 %v52, %v60
  %62 = vst.msk [vmem:[#allocation4] sm:$0xff] %vm45, %v61
  // Predicated region
  $region14: #{tpu_custom_call.1} parent=0 // pred_check
    %p63 = pneg %p11
  $region15: #{tpu_custom_call.1} parent=0 // pred_check_branch
    %65 = sbr.rel (%p63) target = $region17
  $region16: #{tpu_custom_call.1} parent=0 // pred_region
    %v66 = vld [vmem:[#allocation2] sm:$0xff]
    %v67 = vld [vmem:[#allocation3] sm:$0xff]
    %v68 = vlog2.pop %v67
    %v69 = vmul.f32 %v68, 0.6931472
    %v70 = vadd.f32 %v66, %v69
    %v71 = vld [vmem:[#allocation4] sm:$0xff]
    %v72 = vsub.f32 %v70, %v71
    %v73 = vmax.f32 %v72, 0.0
    %v74 = vsub.f32 0.0, %v73
    %v75 = vmul.f32 %v74, 1.442695
    %v76 = vpow.pop %v75
    %v77 = vsub.f32 1.0, %v76
    %v78 = vmul.f32 %v77, %v77
    %v79 = vmul.f32 %v78, %v73
    %80 = vst.msk [vmem:[%s2] sm:$0xff] %vm45, %v79
  $region17: #{tpu_custom_call.1} parent=0 // pred_fallthru
    _
  // Predicated region
  $region18: #{tpu_custom_call.1} parent=0 // pred_check
    _
  $region19: #{tpu_custom_call.1} parent=0 // pred_check_branch
    %82 = sbr.rel (0) target = $region21
  $region20: #{tpu_custom_call.1} parent=0 // pred_region
    _
  $region21: #{tpu_custom_call.1} parent=0 // pred_fallthru
    _
  // Predicated region
  $region22: #{tpu_custom_call.1} parent=0 // pred_check
    _
  $region23: #{tpu_custom_call.1} parent=0 // pred_check_branch
    %84 = sbr.rel (0) target = $region25
  $region24: #{tpu_custom_call.1} parent=0 // pred_region
    _
  $region25: #{tpu_custom_call.1} parent=0 // pred_fallthru
    _

</llo_original>
